<compile_context>
chip_gen: v6e
topology: v6e:2x2x1
jax: 0.10.0
libtpu: 0.0.40
codegen_flags: <defaults>
</compile_context>

<pallas_src>
import math

import jax
import jax.numpy as jnp
from jax.experimental import pallas as pl
from jax.experimental.pallas import tpu as pltpu


def _round_up(x: int, m: int) -> int:
    return ((x + m - 1) // m) * m


def _sublane_mult(dtype) -> int:
    # sublane packing: 8 for 32-bit, 16 for 16-bit, 32 for 8-bit dtypes.
    return {4: 8, 2: 16, 1: 32}.get(jnp.dtype(dtype).itemsize, 8)


def _pose_enc_kernel(pose_ref, w_ref, out_ref):
    # pose_ref: (tile_b, K) tile streaming through the grid.
    # w_ref:    (K, N)      VMEM-resident (constant block index) weight.
    # One MXU matmul per tile; f32 accumulation.
    out_ref[...] = jnp.dot(
        pose_ref[...], w_ref[...], preferred_element_type=jnp.float32
    ).astype(out_ref.dtype)


def _choose_tile(n_rows: int, sub: int, row_bytes: int) -> int:
    """Row-tile size: few grid steps (amortize ~0.35us/step), >=2 blocks when
    possible (v7x megacore), double-buffered in+out under ~12 MiB (safe for
    v5e's 16 MiB scoped-VMEM default)."""
    if n_rows <= sub:
        return n_rows  # full-extent row block (legal: equals the array dim)
    vmem_rows = max(sub, (((12 << 20) // (2 * row_bytes)) // sub) * sub)
    tile = _round_up(pl.cdiv(n_rows, 2), sub)  # aim for 2 row blocks
    return min(tile, vmem_rows)


def pose_enc_forward(pose, w_kernel, f_out: int, pack: int):
    """Bias-free pose Linear.

    pose:     (..., f_in) float array (any number of leading dims).
    w_kernel: (pack*f_in, pack*f_out); block-diagonal replication of W^T when
              pack > 1 (row-packing), plain W^T when pack == 1.
    Returns:  (..., f_out) in pose.dtype.
    """
    lead = pose.shape[:-1]
    f_in = pose.shape[-1]
    rows = math.prod(lead) if lead else 1
    out_dtype = pose.dtype

    if rows == 0:  # empty leading dim: nothing to compute
        return jnp.zeros((*lead, f_out), out_dtype)

    # Weight pre-cast to the compute dtype (one-off, outside the kernel).
    w = w_kernel if w_kernel.dtype == pose.dtype else w_kernel.astype(pose.dtype)

    pose2d = pose.reshape(rows, f_in)
    rows_p = _round_up(rows, pack)
    if rows_p != rows:
        # Tiny pad (< pack rows) so the packing reshape is exact.
        pose2d = jnp.pad(pose2d, ((0, rows_p - rows), (0, 0)))
    n_rows = rows_p // pack            # packed row count
    k_in = pack * f_in
    k_out = pack * f_out
    pose_pk = pose2d.reshape(n_rows, k_in)  # free, row-major contiguous

    itemsize = jnp.dtype(pose.dtype).itemsize
    sub = _sublane_mult(pose.dtype)
    tile_b = _choose_tile(n_rows, sub, (k_in + k_out) * itemsize)
    grid = (pl.cdiv(n_rows, tile_b),)  # Pallas masks the partial boundary block

    cost = pl.CostEstimate(
        flops=2 * rows * f_in * f_out,  # real (unpacked) work
        transcendentals=0,
        bytes_accessed=itemsize * (rows * f_in + f_in * f_out + rows * f_out),
    )

    out = pl.pallas_call(
        _pose_enc_kernel,
        out_shape=jax.ShapeDtypeStruct((n_rows, k_out), out_dtype),
        grid_spec=pl.GridSpec(
            grid=grid,
            in_specs=[
                # Pose rows stream through the grid.
                pl.BlockSpec((tile_b, k_in), lambda i: (i, 0)),
                # Weight: constant block index -> DMA'd once, VMEM-resident.
                pl.BlockSpec((k_in, k_out), lambda i: (0, 0)),
            ],
            # pack>1: k_out == 128 -> lane-dense unmasked stores.
            # pack==1: k_out == f_out == full array extent -> legal, masked.
            out_specs=pl.BlockSpec((tile_b, k_out), lambda i: (i, 0)),
        ),
        compiler_params=pltpu.CompilerParams(
            # Row blocks are independent -> v7x can shard them across both TCs.
            dimension_semantics=("parallel",),
        ),
        cost_estimate=cost,
    )(pose_pk, w)

    out = out.reshape(rows_p, f_out)   # free unpack of the 128-lane rows
    if rows_p != rows:
        out = out[:rows]
    return out.reshape(*lead, f_out)


class PoseEncPallas:
    """Mirror of the PyTorch PoseEnc module (bias-free Linear on pose features)."""

    def __init__(self, n_positional_obs, output_size, key):
        # PoseEnc bumps 3 -> 5 positional feature slots; the Linear then maps
        # the (already 5-wide) pose vector to output_size, exactly as in Torch.
        if n_positional_obs == 3:
            n_positional_obs += 2
        self._n_positional_obs = n_positional_obs
        self._output_size = output_size

        # TODO(synk): synthetic uniform init (PyTorch uses kaiming-uniform);
        # load real checkpoint weights via `load_weight` for exact parity.
        bound = 1.0 / math.sqrt(float(n_positional_obs))
        w = jax.random.uniform(
            key, (output_size, n_positional_obs), jnp.float32,
            minval=-bound, maxval=bound,
        )
        self._set_weight(w)

    def _set_weight(self, w):
        """w: (output_size, n_positional_obs), PyTorch Linear layout."""
        assert w.shape == (self._output_size, self._n_positional_obs)
        self.weight = w
        w_t = jnp.transpose(w)  # (f_in, f_out)
        f_in, f_out = w_t.shape

        # Row-packing factor: pack `p` poses per kernel row so the kernel's
        # output row is exactly 128 lanes (no wasted writeback, no lane slice).
        if 0 < f_out <= 128 and 128 % f_out == 0:
            p = 128 // f_out
        else:
            p = 1
        self._pack = p

        if p == 1:
            self.w_kernel = w_t
        else:
            # Block-diagonal (p*f_in, p*f_out): out[j*f_out+f] =
            #   sum_k packed_x[j*f_in+k] * w_t[k, f]
            eye = jnp.eye(p, dtype=w_t.dtype)
            self.w_kernel = jnp.einsum("ij,kf->ikjf", eye, w_t).reshape(
                p * f_in, p * f_out)

    def load_weight(self, w):
        self._set_weight(jnp.asarray(w, jnp.float32))

    @property
    def n_out_feats(self):
        return self._output_size

    def __call__(self, observation):
        pose = observation["pose"]  # (..., f_in)
        assert pose.shape[-1] == self._n_positional_obs, (
            pose.shape, self._n_positional_obs)
        return pose_enc_forward(pose, self.w_kernel, self._output_size, self._pack)


def _ref_linear(pose, w_t):
    # Exact-f32 VPU reference (avoids MXU precision differences).
    return jnp.sum(pose[..., :, None] * w_t, axis=-2)


if __name__ == "__main__":
    key = jax.random.PRNGKey(0)
    k_w, k_x, k_x3, k_xr, k_w2, k_x2 = jax.random.split(key, 6)

    # observation_space 'current_context_pose' last dim = 3 -> module uses 5 features.
    n_positional_obs = 3
    output_size = 32
    batch = 8

    model = PoseEncPallas(n_positional_obs, output_size, k_w)
    w_t = jnp.transpose(model.weight)  # (f_in, f_out)

    # Tolerance covers possible reduced-precision MXU passes at DEFAULT matmul
    # precision; packing/layout bugs would produce O(1) errors, easily caught.
    tol = dict(atol=2e-2, rtol=2e-2)

    # --- 2-D pose: (batch, F_in), row-packed lane-dense path ----------------
    pose = jax.random.normal(k_x, (batch, model._n_positional_obs), jnp.float32)
    out = jax.block_until_ready(model({"pose": pose}))
    assert out.shape == (batch, output_size)
    assert jnp.allclose(out, _ref_linear(pose, w_t), **tol)

    # --- 3-D pose: (batch, frames, F_in), one fused/batched call ------------
    pose3 = jax.random.normal(k_x3, (2, 4, model._n_positional_obs), jnp.float32)
    out3 = jax.block_until_ready(model({"pose": pose3}))
    assert out3.shape == (2, 4, output_size)
    assert jnp.allclose(out3, _ref_linear(pose3, w_t), **tol)

    # --- rows not a multiple of the pack factor (tiny pad + slice path) -----
    poser = jax.random.normal(k_xr, (3, model._n_positional_obs), jnp.float32)
    outr = jax.block_until_ready(model({"pose": poser}))
    assert outr.shape == (3, output_size)
    assert jnp.allclose(outr, _ref_linear(poser, w_t), **tol)

    # --- fallback path: output_size not a divisor of 128 (pack == 1) --------
    model2 = PoseEncPallas(n_positional_obs, 48, k_w2)
    w2_t = jnp.transpose(model2.weight)
    pose2 = jax.random.normal(k_x2, (batch, model2._n_positional_obs), jnp.float32)
    out2 = jax.block_until_ready(model2({"pose": pose2}))
    assert out2.shape == (batch, 48)
    assert jnp.allclose(out2, _ref_linear(pose2, w2_t), **tol)

    print("KERNEL_OK")
</pallas_src>

<mosaic_0001>
module attributes {stable_mosaic.version = 11 : i64} {
  func.func @_pose_enc_kernel(%arg0: i32, %arg1: memref<2x20xf32, #tpu.memory_space<vmem>>, %arg2: memref<20x128xf32, #tpu.memory_space<vmem>>, %arg3: memref<2x128xf32, #tpu.memory_space<vmem>>) attributes {dimension_semantics = [#tpu.dimension_semantics<parallel>], iteration_bounds = array<i64: 1>, scalar_prefetch = 0 : i64, scratch_operands = 0 : i64, tpu.core_type = #tpu.core_type<tc>, window_params = [{transform_indices = @transform_0, window_bounds = array<i64: 2, 20>}, {pipeline_mode = #tpu.pipeline_mode<synchronous>, transform_indices = @transform_1, window_bounds = array<i64: 20, 128>}, {transform_indices = @transform_2, window_bounds = array<i64: 2, 128>}]} {
    %c0 = arith.constant 0 : index
    %c0_0 = arith.constant 0 : index
    %0 = vector.load %arg1[%c0, %c0_0] : memref<2x20xf32, #tpu.memory_space<vmem>>, vector<2x20xf32>
    %c0_1 = arith.constant 0 : index
    %c0_2 = arith.constant 0 : index
    %1 = vector.load %arg2[%c0_1, %c0_2] : memref<20x128xf32, #tpu.memory_space<vmem>>, vector<20x128xf32>
    %cst = arith.constant dense<0.000000e+00> : vector<2x128xf32>
    %2 = tpu.matmul %0, %1, %cst {dimension_numbers = #tpu.dot_dimension_numbers<[1], [0], [0], [1], [0, 0, 1, 1], [], []>} : vector<2x20xf32>, vector<20x128xf32>, vector<2x128xf32> -> vector<2x128xf32>
    %c0_3 = arith.constant 0 : index
    %c0_4 = arith.constant 0 : index
    %3 = vector.load %arg3[%c0_3, %c0_4] : memref<2x128xf32, #tpu.memory_space<vmem>>, vector<2x128xf32>
    tpu.vector_store %arg3[%c0_3, %c0_4], %2 {strides = array<i32>} : memref<2x128xf32, #tpu.memory_space<vmem>>, vector<2x128xf32>,
    return
  }
  func.func @transform_0(%arg0: i32) -> (i32, i32) {
    %c0_i32 = arith.constant 0 : i32
    %c0_i32_0 = arith.constant 0 : i32
    return %arg0, %c0_i32 : i32, i32
  }
  func.func @transform_1(%arg0: i32) -> (i32, i32) {
    %c0_i32 = arith.constant 0 : i32
    %c0_i32_0 = arith.constant 0 : i32
    %c0_i32_1 = arith.constant 0 : i32
    return %c0_i32, %c0_i32_0 : i32, i32
  }
  func.func @transform_2(%arg0: i32) -> (i32, i32) {
    %c0_i32 = arith.constant 0 : i32
    %c0_i32_0 = arith.constant 0 : i32
    return %arg0, %c0_i32 : i32, i32
  }
}

</mosaic_0001>

<llo_original>
// kernel: tpu_custom_call.1
$region0: #{tpu_custom_call.1}
  #allocation0 [shape = 'u32[]', space=smem, size = 0x4, offset = 0x4, fixed_abs, tag = 'smem constant byte address 0x4 - core index']
  #allocation1 [shape = 'u32[144,128]{1,0:T(1,128)}', space=vmem, size = 0x12000, scoped, tag = 'internal scratch']
  %s0 = inlined_call_operand.hbm [shape: f32[2,20], index: 0, kind: input, shape index: {}]
  %s1 = inlined_call_operand.hbm [shape: f32[20,128], index: 1, kind: input, shape index: {}]
  %s2 = inlined_call_operand.hbm [shape: f32[2,128], index: 2, kind: output, shape index: {}]
  %s3 = sld [smem:[#allocation0]]
  $region26: #{tpu_custom_call.1} parent=0
    _
  %s5 = ssub.s32 1, %s3
  %s6 = scalar_select 0, %s5, %s3
  $region1: #{tpu_custom_call.1} parent=0
    #allocation2 [shape = 'u8[1024]{0}', space=vmem, size = 0x400, scoped, tag = 'input window, operand 0, single buffered']
    #allocation3 [shape = 's32[1]{0}', space=sflag, size = 0x4, scoped, tag = 'scoped memory for tpu_custom_call.1']
    #allocation4 [shape = 's32[1]{0}', space=sflag, size = 0x4, scoped, tag = 'scoped memory for tpu_custom_call.1']
    #allocation5 [shape = 'u8[12288]{0}', space=vmem, size = 0x3000, scoped, tag = 'input window, operand 1, single buffered']
    #allocation6 [shape = 's32[1]{0}', space=sflag, size = 0x4, scoped, tag = 'scoped memory for tpu_custom_call.1']
    #allocation7 [shape = 'u8[1024]{0}', space=vmem, size = 0x400, scoped, tag = 'output window, operand 0, single buffered']
    %7 = vsyncpa [#allocation3], 0
    %8 = vsyncpa [#allocation6], 0
    %9 = vsyncpa [#allocation4], 0
    // Predicated region
    $region2: #{tpu_custom_call.1} parent=1 // pred_check
      _
    $region3: #{tpu_custom_call.1} parent=1 // pred_check_branch
      %11 = sbr.rel (0) target = $region5
    $region4: #{tpu_custom_call.1} parent=1 // pred_region
      %s13 = ssub.s32 32, 32
      %14 = vsyncadd [#allocation3], %s13
      %s16 = sshll.u32 [#allocation2], 4
      %s17 = int_to_ptr.vmem [resolvable:$true] %s16
      %19 = dma.hbm_to_vmem [thread:$0]  %s0, 32, %s17, [#allocation3]
    $region5: #{tpu_custom_call.1} parent=1 // pred_fallthru
      _
    // Predicated region
    $region6: #{tpu_custom_call.1} parent=1 // pred_check
      _
    $region7: #{tpu_custom_call.1} parent=1 // pred_check_branch
      %21 = sbr.rel (0) target = $region9
    $region8: #{tpu_custom_call.1} parent=1 // pred_region
      %s23 = ssub.s32 384, 384
      %24 = vsyncadd [#allocation6], %s23
      %s25 = sshll.u32 [#allocation5], 4
      %s26 = int_to_ptr.vmem [resolvable:$true] %s25
      %31 = dma.hbm_to_vmem [thread:$0]  %s1, 384, %s26, [#allocation6], 128, 128, 8
    $region9: #{tpu_custom_call.1} parent=1 // pred_fallthru
      _
    // Predicated region
    $region10: #{tpu_custom_call.1} parent=1 // pred_check
      _
    $region11: #{tpu_custom_call.1} parent=1 // pred_check_branch
      %33 = sbr.rel (0) target = $region13
    $region12: #{tpu_custom_call.1} parent=1 // pred_region
      %34 = dma.done [#allocation3], 32
    $region13: #{tpu_custom_call.1} parent=1 // pred_fallthru
      _
    // Predicated region
    $region14: #{tpu_custom_call.1} parent=1 // pred_check
      _
    $region15: #{tpu_custom_call.1} parent=1 // pred_check_branch
      %36 = sbr.rel (0) target = $region17
    $region16: #{tpu_custom_call.1} parent=1 // pred_region
      %37 = dma.done [#allocation6], 384
    $region17: #{tpu_custom_call.1} parent=1 // pred_fallthru
      _
    %v38 = vld [vmem:[#allocation2] sm:$0x3]
    %v39 = vld [vmem:[#allocation5] sm:$0xff]
    %v40 = vld [vmem:[#allocation5 + $0x8] sm:$0xff]
    %v41 = vld [vmem:[#allocation5 + $0x10] sm:$0xf]
    %vm42 = vcmask 162816
    %v44 = vsel %vm42, %v38, 0
    %vm46 = vcmask 1043456
    %v48 = vsel %vm46, %v41, 0
    %50 = vmatprep.subr.mxu0 0.0
    %51 = vmatpush1.msra.mxu0 0.0
    %52 = vmatprep.subr.mxu0 0.0
    %53 = vmatpush1.msra.mxu0 0.0
    %54 = vmatprep.subr.mxu0 0.0
    %55 = vmatpush1.msra.mxu0 0.0
    %56 = vmatprep.subr.mxu0 0.0
    %57 = vmatpush1.msra.mxu0 0.0
    %58 = vmatprep.subr.mxu0 0.0
    %59 = vmatpush1.msra.mxu0 0.0
    %60 = vmatprep.subr.mxu0 0.0
    %61 = vmatpush1.msra.mxu0 0.0
    %62 = vmatprep.subr.mxu0 0.0
    %63 = vmatpush1.msra.mxu0 0.0
    %64 = vmatprep.subr.mxu0 0.0
    %65 = vmatpush1.msra.mxu0 0.0
    %66 = vmatprep.subr.mxu0 0.0
    %67 = vmatpush1.msra.mxu0 0.0
    %68 = vmatprep.subr.mxu0 0.0
    %69 = vmatpush1.msra.mxu0 0.0
    %70 = vmatprep.subr.mxu0 0.0
    %71 = vmatpush1.msra.mxu0 0.0
    %72 = vmatprep.subr.mxu0 0.0
    %73 = vmatpush1.msra.mxu0 0.0
    %74 = vmatprep.subr.mxu0 0.0
    %75 = vmatpush1.msra.mxu0 0.0
    %76 = vmatprep.subr.mxu0 0.0
    %77 = vmatpush1.msra.mxu0 %v48
    %78 = vmatprep.subr.mxu0 0.0
    %79 = vmatpush1.msra.mxu0 %v40
    %80 = vmatprep.subr.mxu0 0.0
    %81 = vmatpush1.msra.mxu0 %v39
    %82 = vmatprep.subr.mxu0 0.0
    %83 = vmatpush2.msra.mxu0 0.0
    %84 = vmatprep.subr.mxu0 0.0
    %85 = vmatpush2.msra.mxu0 0.0
    %86 = vmatprep.subr.mxu0 0.0
    %87 = vmatpush2.msra.mxu0 0.0
    %88 = vmatprep.subr.mxu0 0.0
    %89 = vmatpush2.msra.mxu0 0.0
    %90 = vmatprep.subr.mxu0 0.0
    %91 = vmatpush2.msra.mxu0 0.0
    %92 = vmatprep.subr.mxu0 0.0
    %93 = vmatpush2.msra.mxu0 0.0
    %94 = vmatprep.subr.mxu0 0.0
    %95 = vmatpush2.msra.mxu0 0.0
    %96 = vmatprep.subr.mxu0 0.0
    %97 = vmatpush2.msra.mxu0 0.0
    %98 = vmatprep.subr.mxu0 0.0
    %99 = vmatpush2.msra.mxu0 0.0
    %100 = vmatprep.subr.mxu0 0.0
    %101 = vmatpush2.msra.mxu0 0.0
    %102 = vmatprep.subr.mxu0 0.0
    %103 = vmatpush2.msra.mxu0 0.0
    %104 = vmatprep.subr.mxu0 0.0
    %105 = vmatpush2.msra.mxu0 0.0
    %106 = vmatprep.subr.mxu0 0.0
    %107 = vmatpush2.msra.mxu0 0.0
    %108 = vmatprep.subr.mxu0 0.0
    %109 = vmatpush2.msra.mxu0 0.0
    %110 = vmatprep.subr.mxu0 0.0
    %111 = vmatpush2.msra.mxu0 0.0
    %112 = vmatprep.subr.mxu0 0.0
    %113 = vmatpush2.msra.mxu0 0.0
    %114 = vmatprep.mubr.f32.mxu0 0.0
    %115 = vmatmul.mubr.f32.gmra.mxu0 %v44
    %v116 = vpop.f32.mrf.mxu0
    %v117 = vadd.f32 0.0, %v116
    %v118 = vpop.f32.mrf.mxu0
    %119 = vdwg.mxu0
    %120 = vst [vmem:[#allocation7] sm:$0x3] %v117
    // Predicated region
    $region18: #{tpu_custom_call.1} parent=1 // pred_check
      _
    $region19: #{tpu_custom_call.1} parent=1 // pred_check_branch
      %122 = sbr.rel (0) target = $region21
    $region20: #{tpu_custom_call.1} parent=1 // pred_region
      %s124 = ssub.s32 32, 32
      %125 = vsyncadd [#allocation4], %s124
      %s127 = sshll.u32 [#allocation7], 4
      %s128 = int_to_ptr.vmem [resolvable:$true] %s127
      %130 = dma.vmem_to_hbm [thread:$0]  %s128, 32, %s2, [#allocation4]
    $region21: #{tpu_custom_call.1} parent=1 // pred_fallthru
      _
    // Predicated region
    $region22: #{tpu_custom_call.1} parent=1 // pred_check
      _
    $region23: #{tpu_custom_call.1} parent=1 // pred_check_branch
      %132 = sbr.rel (0) target = $region25
    $region24: #{tpu_custom_call.1} parent=1 // pred_region
      %133 = dma.done [#allocation4], 32
    $region25: #{tpu_custom_call.1} parent=1 // pred_fallthru
      _
    %134 = vsyncpa [#allocation3], 1
    %135 = vsyncpa [#allocation6], 1
    %136 = vsyncpa [#allocation4], 1

</llo_original>
